<compile_context>
chip_gen: v7x
topology: tpu7x:2x2x1
jax: 0.10.0
libtpu: 0.0.40
codegen_flags: <defaults>
</compile_context>

<pallas_src>
import functools
import math

import jax
import jax.numpy as jnp
from jax.experimental import pallas as pl
from jax.experimental.pallas import tpu as pltpu


# Per-input-block VMEM target; with double-buffering of in + out blocks this keeps the
# footprint comfortably under the v7x 64 MiB VMEM.
_BLOCK_BUDGET_BYTES = 2 * 1024 * 1024
# Cap on trace-time loop unrolling inside a kernel body (compile-time sanity).
_MAX_UNROLL = 256


# ------------------------------ helpers --------------------------------------

def _prod(xs):
    return int(math.prod(xs)) if xs else 1


def _round_up(n, m):
    return -(-n // m) * m


def _padded_tile_bytes(shape, itemsize):
    """Rough VMEM footprint of one block after (8, 128) minor-dim padding."""
    dims = list(shape)
    if dims:
        dims[-1] = _round_up(dims[-1], 128)
    if len(dims) >= 2:
        dims[-2] = _round_up(dims[-2], 8)
    return _prod(tuple(dims)) * itemsize


def _largest_divisor_le(n, cap):
    cap = max(1, min(n, cap))
    for d in range(cap, 0, -1):
        if n % d == 0:
            return d
    return 1


# ------------------------------ kernel bodies --------------------------------

def _adjacent_swap_kernel(a_size, b_size, o_blk, x_ref, o_ref):
    # x_ref, o_ref: (o_blk * A * B, T). For each packed o and b, write a contiguous,
    # lane-dense, unmasked (A, T) slab from a sublane-strided load (the actual swap).
    ab = a_size * b_size
    for oo in range(o_blk):
        base = oo * ab
        for b in range(b_size):
            o_ref[pl.ds(base + b * a_size, a_size), :] = (
                x_ref[pl.ds(base + b, a_size, stride=b_size), :])


def _minor_swap_kernel(o_blk, x_ref, o_ref):
    # x_ref: (o_blk, A, B) -> o_ref: (o_blk, B, A); per-slice lane<->sublane (XLU)
    # transpose of the two minormost dims.
    for oo in range(o_blk):
        o_ref[oo] = x_ref[oo].T


def _general_swap_kernel(b_size, x_ref, o_ref):
    # x_ref: (A, B, T) -> o_ref: (B, A, T); lane dim T untouched. Per b, one
    # contiguous lane-dense (A, T) store from a sublane-strided load.
    for b in range(b_size):
        o_ref[b] = x_ref[:, b, :]


def _lane_swap_kernel(m_size, x_ref, o_ref):
    # x_ref: (A, M, B) -> o_ref: (B, M, A); the swap involves the lane (last) dim,
    # so every m-slice needs a genuine 2D lane<->sublane transpose.
    # TODO(synk): inherently not lane-dense when A < 128; correctness-first fallback.
    for m in range(m_size):
        o_ref[:, m, :] = x_ref[:, m, :].T


# --------------------------------- wrapper -----------------------------------

def trans_forward(x, dim1, dim2):
    """Pallas TPU implementation of `x.transpose(dim1, dim2)` (PyTorch semantics)."""
    nd = x.ndim
    d1, d2 = dim1 % nd, dim2 % nd
    if d1 == d2:
        return x
    d1, d2 = min(d1, d2), max(d1, d2)
    s = x.shape
    o_sz = _prod(s[:d1])
    a_sz = s[d1]
    m_sz = _prod(s[d1 + 1:d2])
    b_sz = s[d2]
    t_sz = _prod(s[d2 + 1:])
    out_full_shape = s[:d1] + (b_sz,) + s[d1 + 1:d2] + (a_sz,) + s[d2 + 1:]
    itemsize = jnp.dtype(x.dtype).itemsize

    if m_sz == 1 and t_sz > 1:
        # Adjacent swap off the lane dim (e.g. NCHW trans(1, 2)).
        per_o_bytes = _padded_tile_bytes((a_sz * b_sz, t_sz), itemsize)
        cap = min(max(_BLOCK_BUDGET_BYTES // max(per_o_bytes, 1), 1),
                  max(_MAX_UNROLL // max(b_sz, 1), 1))
        o_blk = _largest_divisor_le(o_sz, cap)
        o_grp = o_sz // o_blk
        rows = o_blk * a_sz * b_sz
        xv = x.reshape(o_grp, rows, t_sz)
        grid = (o_grp,)
        in_specs = [pl.BlockSpec((None, rows, t_sz), lambda g: (g, 0, 0))]
        out_spec = pl.BlockSpec((None, rows, t_sz), lambda g: (g, 0, 0))
        pallas_out = jax.ShapeDtypeStruct((o_grp, rows, t_sz), x.dtype)
        kernel = functools.partial(_adjacent_swap_kernel, a_sz, b_sz, o_blk)
        blk_shapes = ((rows, t_sz), (rows, t_sz))
    elif m_sz == 1 and t_sz == 1:
        # Swap of the two minormost dims (e.g. trans(2, 3) / trans(-1, -2)).
        per_o_bytes = max(_padded_tile_bytes((a_sz, b_sz), itemsize),
                          _padded_tile_bytes((b_sz, a_sz), itemsize))
        cap = min(max(_BLOCK_BUDGET_BYTES // max(per_o_bytes, 1), 1), _MAX_UNROLL)
        o_blk = _largest_divisor_le(o_sz, cap)
        o_grp = o_sz // o_blk
        xv = x.reshape(o_sz, a_sz, b_sz)
        grid = (o_grp,)
        in_specs = [pl.BlockSpec((o_blk, a_sz, b_sz), lambda g: (g, 0, 0))]
        out_spec = pl.BlockSpec((o_blk, b_sz, a_sz), lambda g: (g, 0, 0))
        pallas_out = jax.ShapeDtypeStruct((o_sz, b_sz, a_sz), x.dtype)
        kernel = functools.partial(_minor_swap_kernel, o_blk)
        blk_shapes = ((o_blk, a_sz, b_sz), (o_blk, b_sz, a_sz))
    elif t_sz > 1:
        # Non-adjacent swap with the lane dim untouched: grid over (outer, middle).
        # TODO(synk): could batch (o, m) per block like the paths above if this ever
        # becomes the hot case.
        xv = x.reshape(o_sz, a_sz, m_sz, b_sz, t_sz)
        grid = (o_sz, m_sz)
        in_specs = [pl.BlockSpec((None, a_sz, None, b_sz, t_sz),
                                 lambda o, m: (o, 0, m, 0, 0))]
        out_spec = pl.BlockSpec((None, b_sz, None, a_sz, t_sz),
                                lambda o, m: (o, 0, m, 0, 0))
        pallas_out = jax.ShapeDtypeStruct((o_sz, b_sz, m_sz, a_sz, t_sz), x.dtype)
        kernel = functools.partial(_general_swap_kernel, b_sz)
        blk_shapes = ((a_sz, b_sz, t_sz), (b_sz, a_sz, t_sz))
    else:
        # Swap involves the last (lane) dim and is non-adjacent (e.g. NCHW trans(1,3)).
        xv = x.reshape(o_sz, a_sz, m_sz, b_sz)
        grid = (o_sz,)
        in_specs = [pl.BlockSpec((None, a_sz, m_sz, b_sz), lambda o: (o, 0, 0, 0))]
        out_spec = pl.BlockSpec((None, b_sz, m_sz, a_sz), lambda o: (o, 0, 0, 0))
        pallas_out = jax.ShapeDtypeStruct((o_sz, b_sz, m_sz, a_sz), x.dtype)
        kernel = functools.partial(_lane_swap_kernel, m_sz)
        blk_shapes = ((a_sz, m_sz, b_sz), (b_sz, m_sz, a_sz))

    # Scoped-VMEM budget: in + out blocks, double-buffered by the pipeline, + headroom.
    needed = 2 * sum(_padded_tile_bytes(bs, itemsize) for bs in blk_shapes) + (1 << 20)
    vmem_limit = int(min(max(needed, 4 << 20), 64 << 20))

    out = pl.pallas_call(
        kernel,
        out_shape=pallas_out,
        grid=grid,
        in_specs=in_specs,
        out_specs=out_spec,
        compiler_params=pltpu.CompilerParams(
            dimension_semantics=("parallel",) * len(grid),
            vmem_limit_bytes=vmem_limit,
        ),
        cost_estimate=pl.CostEstimate(
            flops=0,
            transcendentals=0,
            bytes_accessed=2 * x.size * itemsize,
        ),
    )(xv)
    return out.reshape(out_full_shape)


class Trans:
    """Mirror of the PyTorch `trans` module: forward(x) = x.transpose(dim1, dim2)."""

    def __init__(self, dim1, dim2):
        self.dim1 = dim1
        self.dim2 = dim2

    def __call__(self, x):
        return trans_forward(x, self.dim1, self.dim2)


# ----------------------------------- main -------------------------------------

if __name__ == "__main__":
    key = jax.random.PRNGKey(0)
    x = jax.random.normal(key, (2, 4, 16, 16), jnp.float32)   # (N, C, H, W)

    # trans(1, 2): NCHW -> NHCW (adjacent swap, lane dim untouched).
    y = jax.block_until_ready(Trans(1, 2)(x))
    ref = jnp.swapaxes(x, 1, 2)
    assert y.shape == ref.shape == (2, 16, 4, 16)
    assert bool(jnp.array_equal(y, ref)), "trans(1, 2) mismatch"

    # trans(2, 3): NCHW -> NCWH (swap of the two minormost dims).
    y2 = jax.block_until_ready(Trans(2, 3)(x))
    ref2 = jnp.swapaxes(x, 2, 3)
    assert y2.shape == ref2.shape == (2, 4, 16, 16)
    assert bool(jnp.array_equal(y2, ref2)), "trans(2, 3) mismatch"

    # trans(0, 2): non-adjacent swap, lane dim untouched (general path).
    y3 = jax.block_until_ready(Trans(0, 2)(x))
    ref3 = jnp.swapaxes(x, 0, 2)
    assert y3.shape == ref3.shape == (16, 4, 2, 16)
    assert bool(jnp.array_equal(y3, ref3)), "trans(0, 2) mismatch"

    # trans(1, 3): swap involving the last (lane) dim, non-adjacent (new path).
    y4 = jax.block_until_ready(Trans(1, 3)(x))
    ref4 = jnp.swapaxes(x, 1, 3)
    assert y4.shape == ref4.shape == (2, 16, 16, 4)
    assert bool(jnp.array_equal(y4, ref4)), "trans(1, 3) mismatch"

    print("KERNEL_OK")
</pallas_src>

<mosaic_0001>
module attributes {stable_mosaic.version = 11 : i64} {
  func.func @_adjacent_swap_kernel(%arg0: i32, %arg1: memref<1x128x16xf32, #tpu.memory_space<vmem>>, %arg2: memref<1x128x16xf32, #tpu.memory_space<vmem>>) attributes {dimension_semantics = [#tpu.dimension_semantics<parallel>], iteration_bounds = array<i64: 1>, scalar_prefetch = 0 : i64, scratch_operands = 0 : i64, tpu.core_type = #tpu.core_type<tc>, window_params = [{transform_indices = @transform_0, window_bounds = array<i64: 1, 128, 16>}, {transform_indices = @transform_1, window_bounds = array<i64: 1, 128, 16>}]} {
    %c0 = arith.constant 0 : index
    %c0_0 = arith.constant 0 : index
    %c0_1 = arith.constant 0 : index
    %0 = tpu.strided_load %arg1[%c0, %c0_0, %c0_1] {strides = array<i32: 1, 16, 1>} : memref<1x128x16xf32, #tpu.memory_space<vmem>>, vector<1x4x16xf32>
    %1 = vector.shape_cast %0 : vector<1x4x16xf32> to vector<4x16xf32>
    %c0_2 = arith.constant 0 : index
    %c0_3 = arith.constant 0 : index
    %c0_4 = arith.constant 0 : index
    %2 = vector.load %arg2[%c0_2, %c0_3, %c0_4] : memref<1x128x16xf32, #tpu.memory_space<vmem>>, vector<1x4x16xf32>
    %3 = vector.shape_cast %2 : vector<1x4x16xf32> to vector<4x16xf32>
    %4 = vector.shape_cast %1 : vector<4x16xf32> to vector<1x4x16xf32>
    tpu.vector_store %arg2[%c0_2, %c0_3, %c0_4], %4 {strides = array<i32>} : memref<1x128x16xf32, #tpu.memory_space<vmem>>, vector<1x4x16xf32>,
    %c0_5 = arith.constant 0 : index
    %c1 = arith.constant 1 : index
    %c0_6 = arith.constant 0 : index
    %5 = tpu.strided_load %arg1[%c0_5, %c1, %c0_6] {strides = array<i32: 1, 16, 1>} : memref<1x128x16xf32, #tpu.memory_space<vmem>>, vector<1x4x16xf32>
    %6 = vector.shape_cast %5 : vector<1x4x16xf32> to vector<4x16xf32>
    %c0_7 = arith.constant 0 : index
    %c4 = arith.constant 4 : index
    %c0_8 = arith.constant 0 : index
    %7 = vector.load %arg2[%c0_7, %c4, %c0_8] : memref<1x128x16xf32, #tpu.memory_space<vmem>>, vector<1x4x16xf32>
    %8 = vector.shape_cast %7 : vector<1x4x16xf32> to vector<4x16xf32>
    %9 = vector.shape_cast %6 : vector<4x16xf32> to vector<1x4x16xf32>
    tpu.vector_store %arg2[%c0_7, %c4, %c0_8], %9 {strides = array<i32>} : memref<1x128x16xf32, #tpu.memory_space<vmem>>, vector<1x4x16xf32>,
    %c0_9 = arith.constant 0 : index
    %c2 = arith.constant 2 : index
    %c0_10 = arith.constant 0 : index
    %10 = tpu.strided_load %arg1[%c0_9, %c2, %c0_10] {strides = array<i32: 1, 16, 1>} : memref<1x128x16xf32, #tpu.memory_space<vmem>>, vector<1x4x16xf32>
    %11 = vector.shape_cast %10 : vector<1x4x16xf32> to vector<4x16xf32>
    %c0_11 = arith.constant 0 : index
    %c8 = arith.constant 8 : index
    %c0_12 = arith.constant 0 : index
    %12 = vector.load %arg2[%c0_11, %c8, %c0_12] : memref<1x128x16xf32, #tpu.memory_space<vmem>>, vector<1x4x16xf32>
    %13 = vector.shape_cast %12 : vector<1x4x16xf32> to vector<4x16xf32>
    %14 = vector.shape_cast %11 : vector<4x16xf32> to vector<1x4x16xf32>
    tpu.vector_store %arg2[%c0_11, %c8, %c0_12], %14 {strides = array<i32>} : memref<1x128x16xf32, #tpu.memory_space<vmem>>, vector<1x4x16xf32>,
    %c0_13 = arith.constant 0 : index
    %c3 = arith.constant 3 : index
    %c0_14 = arith.constant 0 : index
    %15 = tpu.strided_load %arg1[%c0_13, %c3, %c0_14] {strides = array<i32: 1, 16, 1>} : memref<1x128x16xf32, #tpu.memory_space<vmem>>, vector<1x4x16xf32>
    %16 = vector.shape_cast %15 : vector<1x4x16xf32> to vector<4x16xf32>
    %c0_15 = arith.constant 0 : index
    %c12 = arith.constant 12 : index
    %c0_16 = arith.constant 0 : index
    %17 = vector.load %arg2[%c0_15, %c12, %c0_16] : memref<1x128x16xf32, #tpu.memory_space<vmem>>, vector<1x4x16xf32>
    %18 = vector.shape_cast %17 : vector<1x4x16xf32> to vector<4x16xf32>
    %19 = vector.shape_cast %16 : vector<4x16xf32> to vector<1x4x16xf32>
    tpu.vector_store %arg2[%c0_15, %c12, %c0_16], %19 {strides = array<i32>} : memref<1x128x16xf32, #tpu.memory_space<vmem>>, vector<1x4x16xf32>,
    %c0_17 = arith.constant 0 : index
    %c4_18 = arith.constant 4 : index
    %c0_19 = arith.constant 0 : index
    %20 = tpu.strided_load %arg1[%c0_17, %c4_18, %c0_19] {strides = array<i32: 1, 16, 1>} : memref<1x128x16xf32, #tpu.memory_space<vmem>>, vector<1x4x16xf32>
    %21 = vector.shape_cast %20 : vector<1x4x16xf32> to vector<4x16xf32>
    %c0_20 = arith.constant 0 : index
    %c16 = arith.constant 16 : index
    %c0_21 = arith.constant 0 : index
    %22 = vector.load %arg2[%c0_20, %c16, %c0_21] : memref<1x128x16xf32, #tpu.memory_space<vmem>>, vector<1x4x16xf32>
    %23 = vector.shape_cast %22 : vector<1x4x16xf32> to vector<4x16xf32>
    %24 = vector.shape_cast %21 : vector<4x16xf32> to vector<1x4x16xf32>
    tpu.vector_store %arg2[%c0_20, %c16, %c0_21], %24 {strides = array<i32>} : memref<1x128x16xf32, #tpu.memory_space<vmem>>, vector<1x4x16xf32>,
    %c0_22 = arith.constant 0 : index
    %c5 = arith.constant 5 : index
    %c0_23 = arith.constant 0 : index
    %25 = tpu.strided_load %arg1[%c0_22, %c5, %c0_23] {strides = array<i32: 1, 16, 1>} : memref<1x128x16xf32, #tpu.memory_space<vmem>>, vector<1x4x16xf32>
    %26 = vector.shape_cast %25 : vector<1x4x16xf32> to vector<4x16xf32>
    %c0_24 = arith.constant 0 : index
    %c20 = arith.constant 20 : index
    %c0_25 = arith.constant 0 : index
    %27 = vector.load %arg2[%c0_24, %c20, %c0_25] : memref<1x128x16xf32, #tpu.memory_space<vmem>>, vector<1x4x16xf32>
    %28 = vector.shape_cast %27 : vector<1x4x16xf32> to vector<4x16xf32>
    %29 = vector.shape_cast %26 : vector<4x16xf32> to vector<1x4x16xf32>
    tpu.vector_store %arg2[%c0_24, %c20, %c0_25], %29 {strides = array<i32>} : memref<1x128x16xf32, #tpu.memory_space<vmem>>, vector<1x4x16xf32>,
    %c0_26 = arith.constant 0 : index
    %c6 = arith.constant 6 : index
    %c0_27 = arith.constant 0 : index
    %30 = tpu.strided_load %arg1[%c0_26, %c6, %c0_27] {strides = array<i32: 1, 16, 1>} : memref<1x128x16xf32, #tpu.memory_space<vmem>>, vector<1x4x16xf32>
    %31 = vector.shape_cast %30 : vector<1x4x16xf32> to vector<4x16xf32>
    %c0_28 = arith.constant 0 : index
    %c24 = arith.constant 24 : index
    %c0_29 = arith.constant 0 : index
    %32 = vector.load %arg2[%c0_28, %c24, %c0_29] : memref<1x128x16xf32, #tpu.memory_space<vmem>>, vector<1x4x16xf32>
    %33 = vector.shape_cast %32 : vector<1x4x16xf32> to vector<4x16xf32>
    %34 = vector.shape_cast %31 : vector<4x16xf32> to vector<1x4x16xf32>
    tpu.vector_store %arg2[%c0_28, %c24, %c0_29], %34 {strides = array<i32>} : memref<1x128x16xf32, #tpu.memory_space<vmem>>, vector<1x4x16xf32>,
    %c0_30 = arith.constant 0 : index
    %c7 = arith.constant 7 : index
    %c0_31 = arith.constant 0 : index
    %35 = tpu.strided_load %arg1[%c0_30, %c7, %c0_31] {strides = array<i32: 1, 16, 1>} : memref<1x128x16xf32, #tpu.memory_space<vmem>>, vector<1x4x16xf32>
    %36 = vector.shape_cast %35 : vector<1x4x16xf32> to vector<4x16xf32>
    %c0_32 = arith.constant 0 : index
    %c28 = arith.constant 28 : index
    %c0_33 = arith.constant 0 : index
    %37 = vector.load %arg2[%c0_32, %c28, %c0_33] : memref<1x128x16xf32, #tpu.memory_space<vmem>>, vector<1x4x16xf32>
    %38 = vector.shape_cast %37 : vector<1x4x16xf32> to vector<4x16xf32>
    %39 = vector.shape_cast %36 : vector<4x16xf32> to vector<1x4x16xf32>
    tpu.vector_store %arg2[%c0_32, %c28, %c0_33], %39 {strides = array<i32>} : memref<1x128x16xf32, #tpu.memory_space<vmem>>, vector<1x4x16xf32>,
    %c0_34 = arith.constant 0 : index
    %c8_35 = arith.constant 8 : index
    %c0_36 = arith.constant 0 : index
    %40 = tpu.strided_load %arg1[%c0_34, %c8_35, %c0_36] {strides = array<i32: 1, 16, 1>} : memref<1x128x16xf32, #tpu.memory_space<vmem>>, vector<1x4x16xf32>
    %41 = vector.shape_cast %40 : vector<1x4x16xf32> to vector<4x16xf32>
    %c0_37 = arith.constant 0 : index
    %c32 = arith.constant 32 : index
    %c0_38 = arith.constant 0 : index
    %42 = vector.load %arg2[%c0_37, %c32, %c0_38] : memref<1x128x16xf32, #tpu.memory_space<vmem>>, vector<1x4x16xf32>
    %43 = vector.shape_cast %42 : vector<1x4x16xf32> to vector<4x16xf32>
    %44 = vector.shape_cast %41 : vector<4x16xf32> to vector<1x4x16xf32>
    tpu.vector_store %arg2[%c0_37, %c32, %c0_38], %44 {strides = array<i32>} : memref<1x128x16xf32, #tpu.memory_space<vmem>>, vector<1x4x16xf32>,
    %c0_39 = arith.constant 0 : index
    %c9 = arith.constant 9 : index
    %c0_40 = arith.constant 0 : index
    %45 = tpu.strided_load %arg1[%c0_39, %c9, %c0_40] {strides = array<i32: 1, 16, 1>} : memref<1x128x16xf32, #tpu.memory_space<vmem>>, vector<1x4x16xf32>
    %46 = vector.shape_cast %45 : vector<1x4x16xf32> to vector<4x16xf32>
    %c0_41 = arith.constant 0 : index
    %c36 = arith.constant 36 : index
    %c0_42 = arith.constant 0 : index
    %47 = vector.load %arg2[%c0_41, %c36, %c0_42] : memref<1x128x16xf32, #tpu.memory_space<vmem>>, vector<1x4x16xf32>
    %48 = vector.shape_cast %47 : vector<1x4x16xf32> to vector<4x16xf32>
    %49 = vector.shape_cast %46 : vector<4x16xf32> to vector<1x4x16xf32>
    tpu.vector_store %arg2[%c0_41, %c36, %c0_42], %49 {strides = array<i32>} : memref<1x128x16xf32, #tpu.memory_space<vmem>>, vector<1x4x16xf32>,
    %c0_43 = arith.constant 0 : index
    %c10 = arith.constant 10 : index
    %c0_44 = arith.constant 0 : index
    %50 = tpu.strided_load %arg1[%c0_43, %c10, %c0_44] {strides = array<i32: 1, 16, 1>} : memref<1x128x16xf32, #tpu.memory_space<vmem>>, vector<1x4x16xf32>
    %51 = vector.shape_cast %50 : vector<1x4x16xf32> to vector<4x16xf32>
    %c0_45 = arith.constant 0 : index
    %c40 = arith.constant 40 : index
    %c0_46 = arith.constant 0 : index
    %52 = vector.load %arg2[%c0_45, %c40, %c0_46] : memref<1x128x16xf32, #tpu.memory_space<vmem>>, vector<1x4x16xf32>
    %53 = vector.shape_cast %52 : vector<1x4x16xf32> to vector<4x16xf32>
    %54 = vector.shape_cast %51 : vector<4x16xf32> to vector<1x4x16xf32>
    tpu.vector_store %arg2[%c0_45, %c40, %c0_46], %54 {strides = array<i32>} : memref<1x128x16xf32, #tpu.memory_space<vmem>>, vector<1x4x16xf32>,
    %c0_47 = arith.constant 0 : index
    %c11 = arith.constant 11 : index
    %c0_48 = arith.constant 0 : index
    %55 = tpu.strided_load %arg1[%c0_47, %c11, %c0_48] {strides = array<i32: 1, 16, 1>} : memref<1x128x16xf32, #tpu.memory_space<vmem>>, vector<1x4x16xf32>
    %56 = vector.shape_cast %55 : vector<1x4x16xf32> to vector<4x16xf32>
    %c0_49 = arith.constant 0 : index
    %c44 = arith.constant 44 : index
    %c0_50 = arith.constant 0 : index
    %57 = vector.load %arg2[%c0_49, %c44, %c0_50] : memref<1x128x16xf32, #tpu.memory_space<vmem>>, vector<1x4x16xf32>
    %58 = vector.shape_cast %57 : vector<1x4x16xf32> to vector<4x16xf32>
    %59 = vector.shape_cast %56 : vector<4x16xf32> to vector<1x4x16xf32>
    tpu.vector_store %arg2[%c0_49, %c44, %c0_50], %59 {strides = array<i32>} : memref<1x128x16xf32, #tpu.memory_space<vmem>>, vector<1x4x16xf32>,
    %c0_51 = arith.constant 0 : index
    %c12_52 = arith.constant 12 : index
    %c0_53 = arith.constant 0 : index
    %60 = tpu.strided_load %arg1[%c0_51, %c12_52, %c0_53] {strides = array<i32: 1, 16, 1>} : memref<1x128x16xf32, #tpu.memory_space<vmem>>, vector<1x4x16xf32>
    %61 = vector.shape_cast %60 : vector<1x4x16xf32> to vector<4x16xf32>
    %c0_54 = arith.constant 0 : index
    %c48 = arith.constant 48 : index
    %c0_55 = arith.constant 0 : index
    %62 = vector.load %arg2[%c0_54, %c48, %c0_55] : memref<1x128x16xf32, #tpu.memory_space<vmem>>, vector<1x4x16xf32>
    %63 = vector.shape_cast %62 : vector<1x4x16xf32> to vector<4x16xf32>
    %64 = vector.shape_cast %61 : vector<4x16xf32> to vector<1x4x16xf32>
    tpu.vector_store %arg2[%c0_54, %c48, %c0_55], %64 {strides = array<i32>} : memref<1x128x16xf32, #tpu.memory_space<vmem>>, vector<1x4x16xf32>,
    %c0_56 = arith.constant 0 : index
    %c13 = arith.constant 13 : index
    %c0_57 = arith.constant 0 : index
    %65 = tpu.strided_load %arg1[%c0_56, %c13, %c0_57] {strides = array<i32: 1, 16, 1>} : memref<1x128x16xf32, #tpu.memory_space<vmem>>, vector<1x4x16xf32>
    %66 = vector.shape_cast %65 : vector<1x4x16xf32> to vector<4x16xf32>
    %c0_58 = arith.constant 0 : index
    %c52 = arith.constant 52 : index
    %c0_59 = arith.constant 0 : index
    %67 = vector.load %arg2[%c0_58, %c52, %c0_59] : memref<1x128x16xf32, #tpu.memory_space<vmem>>, vector<1x4x16xf32>
    %68 = vector.shape_cast %67 : vector<1x4x16xf32> to vector<4x16xf32>
    %69 = vector.shape_cast %66 : vector<4x16xf32> to vector<1x4x16xf32>
    tpu.vector_store %arg2[%c0_58, %c52, %c0_59], %69 {strides = array<i32>} : memref<1x128x16xf32, #tpu.memory_space<vmem>>, vector<1x4x16xf32>,
    %c0_60 = arith.constant 0 : index
    %c14 = arith.constant 14 : index
    %c0_61 = arith.constant 0 : index
    %70 = tpu.strided_load %arg1[%c0_60, %c14, %c0_61] {strides = array<i32: 1, 16, 1>} : memref<1x128x16xf32, #tpu.memory_space<vmem>>, vector<1x4x16xf32>
    %71 = vector.shape_cast %70 : vector<1x4x16xf32> to vector<4x16xf32>
    %c0_62 = arith.constant 0 : index
    %c56 = arith.constant 56 : index
    %c0_63 = arith.constant 0 : index
    %72 = vector.load %arg2[%c0_62, %c56, %c0_63] : memref<1x128x16xf32, #tpu.memory_space<vmem>>, vector<1x4x16xf32>
    %73 = vector.shape_cast %72 : vector<1x4x16xf32> to vector<4x16xf32>
    %74 = vector.shape_cast %71 : vector<4x16xf32> to vector<1x4x16xf32>
    tpu.vector_store %arg2[%c0_62, %c56, %c0_63], %74 {strides = array<i32>} : memref<1x128x16xf32, #tpu.memory_space<vmem>>, vector<1x4x16xf32>,
    %c0_64 = arith.constant 0 : index
    %c15 = arith.constant 15 : index
    %c0_65 = arith.constant 0 : index
    %75 = tpu.strided_load %arg1[%c0_64, %c15, %c0_65] {strides = array<i32: 1, 16, 1>} : memref<1x128x16xf32, #tpu.memory_space<vmem>>, vector<1x4x16xf32>
    %76 = vector.shape_cast %75 : vector<1x4x16xf32> to vector<4x16xf32>
    %c0_66 = arith.constant 0 : index
    %c60 = arith.constant 60 : index
    %c0_67 = arith.constant 0 : index
    %77 = vector.load %arg2[%c0_66, %c60, %c0_67] : memref<1x128x16xf32, #tpu.memory_space<vmem>>, vector<1x4x16xf32>
    %78 = vector.shape_cast %77 : vector<1x4x16xf32> to vector<4x16xf32>
    %79 = vector.shape_cast %76 : vector<4x16xf32> to vector<1x4x16xf32>
    tpu.vector_store %arg2[%c0_66, %c60, %c0_67], %79 {strides = array<i32>} : memref<1x128x16xf32, #tpu.memory_space<vmem>>, vector<1x4x16xf32>,
    %c0_68 = arith.constant 0 : index
    %c64 = arith.constant 64 : index
    %c0_69 = arith.constant 0 : index
    %80 = tpu.strided_load %arg1[%c0_68, %c64, %c0_69] {strides = array<i32: 1, 16, 1>} : memref<1x128x16xf32, #tpu.memory_space<vmem>>, vector<1x4x16xf32>
    %81 = vector.shape_cast %80 : vector<1x4x16xf32> to vector<4x16xf32>
    %c0_70 = arith.constant 0 : index
    %c64_71 = arith.constant 64 : index
    %c0_72 = arith.constant 0 : index
    %82 = vector.load %arg2[%c0_70, %c64_71, %c0_72] : memref<1x128x16xf32, #tpu.memory_space<vmem>>, vector<1x4x16xf32>
    %83 = vector.shape_cast %82 : vector<1x4x16xf32> to vector<4x16xf32>
    %84 = vector.shape_cast %81 : vector<4x16xf32> to vector<1x4x16xf32>
    tpu.vector_store %arg2[%c0_70, %c64_71, %c0_72], %84 {strides = array<i32>} : memref<1x128x16xf32, #tpu.memory_space<vmem>>, vector<1x4x16xf32>,
    %c0_73 = arith.constant 0 : index
    %c65 = arith.constant 65 : index
    %c0_74 = arith.constant 0 : index
    %85 = tpu.strided_load %arg1[%c0_73, %c65, %c0_74] {strides = array<i32: 1, 16, 1>} : memref<1x128x16xf32, #tpu.memory_space<vmem>>, vector<1x4x16xf32>
    %86 = vector.shape_cast %85 : vector<1x4x16xf32> to vector<4x16xf32>
    %c0_75 = arith.constant 0 : index
    %c68 = arith.constant 68 : index
    %c0_76 = arith.constant 0 : index
    %87 = vector.load %arg2[%c0_75, %c68, %c0_76] : memref<1x128x16xf32, #tpu.memory_space<vmem>>, vector<1x4x16xf32>
    %88 = vector.shape_cast %87 : vector<1x4x16xf32> to vector<4x16xf32>
    %89 = vector.shape_cast %86 : vector<4x16xf32> to vector<1x4x16xf32>
    tpu.vector_store %arg2[%c0_75, %c68, %c0_76], %89 {strides = array<i32>} : memref<1x128x16xf32, #tpu.memory_space<vmem>>, vector<1x4x16xf32>,
    %c0_77 = arith.constant 0 : index
    %c66 = arith.constant 66 : index
    %c0_78 = arith.constant 0 : index
    %90 = tpu.strided_load %arg1[%c0_77, %c66, %c0_78] {strides = array<i32: 1, 16, 1>} : memref<1x128x16xf32, #tpu.memory_space<vmem>>, vector<1x4x16xf32>
    %91 = vector.shape_cast %90 : vector<1x4x16xf32> to vector<4x16xf32>
    %c0_79 = arith.constant 0 : index
    %c72 = arith.constant 72 : index
    %c0_80 = arith.constant 0 : index
    %92 = vector.load %arg2[%c0_79, %c72, %c0_80] : memref<1x128x16xf32, #tpu.memory_space<vmem>>, vector<1x4x16xf32>
    %93 = vector.shape_cast %92 : vector<1x4x16xf32> to vector<4x16xf32>
    %94 = vector.shape_cast %91 : vector<4x16xf32> to vector<1x4x16xf32>
    tpu.vector_store %arg2[%c0_79, %c72, %c0_80], %94 {strides = array<i32>} : memref<1x128x16xf32, #tpu.memory_space<vmem>>, vector<1x4x16xf32>,
    %c0_81 = arith.constant 0 : index
    %c67 = arith.constant 67 : index
    %c0_82 = arith.constant 0 : index
    %95 = tpu.strided_load %arg1[%c0_81, %c67, %c0_82] {strides = array<i32: 1, 16, 1>} : memref<1x128x16xf32, #tpu.memory_space<vmem>>, vector<1x4x16xf32>
    %96 = vector.shape_cast %95 : vector<1x4x16xf32> to vector<4x16xf32>
    %c0_83 = arith.constant 0 : index
    %c76 = arith.constant 76 : index
    %c0_84 = arith.constant 0 : index
    %97 = vector.load %arg2[%c0_83, %c76, %c0_84] : memref<1x128x16xf32, #tpu.memory_space<vmem>>, vector<1x4x16xf32>
    %98 = vector.shape_cast %97 : vector<1x4x16xf32> to vector<4x16xf32>
    %99 = vector.shape_cast %96 : vector<4x16xf32> to vector<1x4x16xf32>
    tpu.vector_store %arg2[%c0_83, %c76, %c0_84], %99 {strides = array<i32>} : memref<1x128x16xf32, #tpu.memory_space<vmem>>, vector<1x4x16xf32>,
    %c0_85 = arith.constant 0 : index
    %c68_86 = arith.constant 68 : index
    %c0_87 = arith.constant 0 : index
    %100 = tpu.strided_load %arg1[%c0_85, %c68_86, %c0_87] {strides = array<i32: 1, 16, 1>} : memref<1x128x16xf32, #tpu.memory_space<vmem>>, vector<1x4x16xf32>
    %101 = vector.shape_cast %100 : vector<1x4x16xf32> to vector<4x16xf32>
    %c0_88 = arith.constant 0 : index
    %c80 = arith.constant 80 : index
    %c0_89 = arith.constant 0 : index
    %102 = vector.load %arg2[%c0_88, %c80, %c0_89] : memref<1x128x16xf32, #tpu.memory_space<vmem>>, vector<1x4x16xf32>
    %103 = vector.shape_cast %102 : vector<1x4x16xf32> to vector<4x16xf32>
    %104 = vector.shape_cast %101 : vector<4x16xf32> to vector<1x4x16xf32>
    tpu.vector_store %arg2[%c0_88, %c80, %c0_89], %104 {strides = array<i32>} : memref<1x128x16xf32, #tpu.memory_space<vmem>>, vector<1x4x16xf32>,
    %c0_90 = arith.constant 0 : index
    %c69 = arith.constant 69 : index
    %c0_91 = arith.constant 0 : index
    %105 = tpu.strided_load %arg1[%c0_90, %c69, %c0_91] {strides = array<i32: 1, 16, 1>} : memref<1x128x16xf32, #tpu.memory_space<vmem>>, vector<1x4x16xf32>
    %106 = vector.shape_cast %105 : vector<1x4x16xf32> to vector<4x16xf32>
    %c0_92 = arith.constant 0 : index
    %c84 = arith.constant 84 : index
    %c0_93 = arith.constant 0 : index
    %107 = vector.load %arg2[%c0_92, %c84, %c0_93] : memref<1x128x16xf32, #tpu.memory_space<vmem>>, vector<1x4x16xf32>
    %108 = vector.shape_cast %107 : vector<1x4x16xf32> to vector<4x16xf32>
    %109 = vector.shape_cast %106 : vector<4x16xf32> to vector<1x4x16xf32>
    tpu.vector_store %arg2[%c0_92, %c84, %c0_93], %109 {strides = array<i32>} : memref<1x128x16xf32, #tpu.memory_space<vmem>>, vector<1x4x16xf32>,
    %c0_94 = arith.constant 0 : index
    %c70 = arith.constant 70 : index
    %c0_95 = arith.constant 0 : index
    %110 = tpu.strided_load %arg1[%c0_94, %c70, %c0_95] {strides = array<i32: 1, 16, 1>} : memref<1x128x16xf32, #tpu.memory_space<vmem>>, vector<1x4x16xf32>
    %111 = vector.shape_cast %110 : vector<1x4x16xf32> to vector<4x16xf32>
    %c0_96 = arith.constant 0 : index
    %c88 = arith.constant 88 : index
    %c0_97 = arith.constant 0 : index
    %112 = vector.load %arg2[%c0_96, %c88, %c0_97] : memref<1x128x16xf32, #tpu.memory_space<vmem>>, vector<1x4x16xf32>
    %113 = vector.shape_cast %112 : vector<1x4x16xf32> to vector<4x16xf32>
    %114 = vector.shape_cast %111 : vector<4x16xf32> to vector<1x4x16xf32>
    tpu.vector_store %arg2[%c0_96, %c88, %c0_97], %114 {strides = array<i32>} : memref<1x128x16xf32, #tpu.memory_space<vmem>>, vector<1x4x16xf32>,
    %c0_98 = arith.constant 0 : index
    %c71 = arith.constant 71 : index
    %c0_99 = arith.constant 0 : index
    %115 = tpu.strided_load %arg1[%c0_98, %c71, %c0_99] {strides = array<i32: 1, 16, 1>} : memref<1x128x16xf32, #tpu.memory_space<vmem>>, vector<1x4x16xf32>
    %116 = vector.shape_cast %115 : vector<1x4x16xf32> to vector<4x16xf32>
    %c0_100 = arith.constant 0 : index
    %c92 = arith.constant 92 : index
    %c0_101 = arith.constant 0 : index
    %117 = vector.load %arg2[%c0_100, %c92, %c0_101] : memref<1x128x16xf32, #tpu.memory_space<vmem>>, vector<1x4x16xf32>
    %118 = vector.shape_cast %117 : vector<1x4x16xf32> to vector<4x16xf32>
    %119 = vector.shape_cast %116 : vector<4x16xf32> to vector<1x4x16xf32>
    tpu.vector_store %arg2[%c0_100, %c92, %c0_101], %119 {strides = array<i32>} : memref<1x128x16xf32, #tpu.memory_space<vmem>>, vector<1x4x16xf32>,
    %c0_102 = arith.constant 0 : index
    %c72_103 = arith.constant 72 : index
    %c0_104 = arith.constant 0 : index
    %120 = tpu.strided_load %arg1[%c0_102, %c72_103, %c0_104] {strides = array<i32: 1, 16, 1>} : memref<1x128x16xf32, #tpu.memory_space<vmem>>, vector<1x4x16xf32>
    %121 = vector.shape_cast %120 : vector<1x4x16xf32> to vector<4x16xf32>
    %c0_105 = arith.constant 0 : index
    %c96 = arith.constant 96 : index
    %c0_106 = arith.constant 0 : index
    %122 = vector.load %arg2[%c0_105, %c96, %c0_106] : memref<1x128x16xf32, #tpu.memory_space<vmem>>, vector<1x4x16xf32>
    %123 = vector.shape_cast %122 : vector<1x4x16xf32> to vector<4x16xf32>
    %124 = vector.shape_cast %121 : vector<4x16xf32> to vector<1x4x16xf32>
    tpu.vector_store %arg2[%c0_105, %c96, %c0_106], %124 {strides = array<i32>} : memref<1x128x16xf32, #tpu.memory_space<vmem>>, vector<1x4x16xf32>,
    %c0_107 = arith.constant 0 : index
    %c73 = arith.constant 73 : index
    %c0_108 = arith.constant 0 : index
    %125 = tpu.strided_load %arg1[%c0_107, %c73, %c0_108] {strides = array<i32: 1, 16, 1>} : memref<1x128x16xf32, #tpu.memory_space<vmem>>, vector<1x4x16xf32>
    %126 = vector.shape_cast %125 : vector<1x4x16xf32> to vector<4x16xf32>
    %c0_109 = arith.constant 0 : index
    %c100 = arith.constant 100 : index
    %c0_110 = arith.constant 0 : index
    %127 = vector.load %arg2[%c0_109, %c100, %c0_110] : memref<1x128x16xf32, #tpu.memory_space<vmem>>, vector<1x4x16xf32>
    %128 = vector.shape_cast %127 : vector<1x4x16xf32> to vector<4x16xf32>
    %129 = vector.shape_cast %126 : vector<4x16xf32> to vector<1x4x16xf32>
    tpu.vector_store %arg2[%c0_109, %c100, %c0_110], %129 {strides = array<i32>} : memref<1x128x16xf32, #tpu.memory_space<vmem>>, vector<1x4x16xf32>,
    %c0_111 = arith.constant 0 : index
    %c74 = arith.constant 74 : index
    %c0_112 = arith.constant 0 : index
    %130 = tpu.strided_load %arg1[%c0_111, %c74, %c0_112] {strides = array<i32: 1, 16, 1>} : memref<1x128x16xf32, #tpu.memory_space<vmem>>, vector<1x4x16xf32>
    %131 = vector.shape_cast %130 : vector<1x4x16xf32> to vector<4x16xf32>
    %c0_113 = arith.constant 0 : index
    %c104 = arith.constant 104 : index
    %c0_114 = arith.constant 0 : index
    %132 = vector.load %arg2[%c0_113, %c104, %c0_114] : memref<1x128x16xf32, #tpu.memory_space<vmem>>, vector<1x4x16xf32>
    %133 = vector.shape_cast %132 : vector<1x4x16xf32> to vector<4x16xf32>
    %134 = vector.shape_cast %131 : vector<4x16xf32> to vector<1x4x16xf32>
    tpu.vector_store %arg2[%c0_113, %c104, %c0_114], %134 {strides = array<i32>} : memref<1x128x16xf32, #tpu.memory_space<vmem>>, vector<1x4x16xf32>,
    %c0_115 = arith.constant 0 : index
    %c75 = arith.constant 75 : index
    %c0_116 = arith.constant 0 : index
    %135 = tpu.strided_load %arg1[%c0_115, %c75, %c0_116] {strides = array<i32: 1, 16, 1>} : memref<1x128x16xf32, #tpu.memory_space<vmem>>, vector<1x4x16xf32>
    %136 = vector.shape_cast %135 : vector<1x4x16xf32> to vector<4x16xf32>
    %c0_117 = arith.constant 0 : index
    %c108 = arith.constant 108 : index
    %c0_118 = arith.constant 0 : index
    %137 = vector.load %arg2[%c0_117, %c108, %c0_118] : memref<1x128x16xf32, #tpu.memory_space<vmem>>, vector<1x4x16xf32>
    %138 = vector.shape_cast %137 : vector<1x4x16xf32> to vector<4x16xf32>
    %139 = vector.shape_cast %136 : vector<4x16xf32> to vector<1x4x16xf32>
    tpu.vector_store %arg2[%c0_117, %c108, %c0_118], %139 {strides = array<i32>} : memref<1x128x16xf32, #tpu.memory_space<vmem>>, vector<1x4x16xf32>,
    %c0_119 = arith.constant 0 : index
    %c76_120 = arith.constant 76 : index
    %c0_121 = arith.constant 0 : index
    %140 = tpu.strided_load %arg1[%c0_119, %c76_120, %c0_121] {strides = array<i32: 1, 16, 1>} : memref<1x128x16xf32, #tpu.memory_space<vmem>>, vector<1x4x16xf32>
    %141 = vector.shape_cast %140 : vector<1x4x16xf32> to vector<4x16xf32>
    %c0_122 = arith.constant 0 : index
    %c112 = arith.constant 112 : index
    %c0_123 = arith.constant 0 : index
    %142 = vector.load %arg2[%c0_122, %c112, %c0_123] : memref<1x128x16xf32, #tpu.memory_space<vmem>>, vector<1x4x16xf32>
    %143 = vector.shape_cast %142 : vector<1x4x16xf32> to vector<4x16xf32>
    %144 = vector.shape_cast %141 : vector<4x16xf32> to vector<1x4x16xf32>
    tpu.vector_store %arg2[%c0_122, %c112, %c0_123], %144 {strides = array<i32>} : memref<1x128x16xf32, #tpu.memory_space<vmem>>, vector<1x4x16xf32>,
    %c0_124 = arith.constant 0 : index
    %c77 = arith.constant 77 : index
    %c0_125 = arith.constant 0 : index
    %145 = tpu.strided_load %arg1[%c0_124, %c77, %c0_125] {strides = array<i32: 1, 16, 1>} : memref<1x128x16xf32, #tpu.memory_space<vmem>>, vector<1x4x16xf32>
    %146 = vector.shape_cast %145 : vector<1x4x16xf32> to vector<4x16xf32>
    %c0_126 = arith.constant 0 : index
    %c116 = arith.constant 116 : index
    %c0_127 = arith.constant 0 : index
    %147 = vector.load %arg2[%c0_126, %c116, %c0_127] : memref<1x128x16xf32, #tpu.memory_space<vmem>>, vector<1x4x16xf32>
    %148 = vector.shape_cast %147 : vector<1x4x16xf32> to vector<4x16xf32>
    %149 = vector.shape_cast %146 : vector<4x16xf32> to vector<1x4x16xf32>
    tpu.vector_store %arg2[%c0_126, %c116, %c0_127], %149 {strides = array<i32>} : memref<1x128x16xf32, #tpu.memory_space<vmem>>, vector<1x4x16xf32>,
    %c0_128 = arith.constant 0 : index
    %c78 = arith.constant 78 : index
    %c0_129 = arith.constant 0 : index
    %150 = tpu.strided_load %arg1[%c0_128, %c78, %c0_129] {strides = array<i32: 1, 16, 1>} : memref<1x128x16xf32, #tpu.memory_space<vmem>>, vector<1x4x16xf32>
    %151 = vector.shape_cast %150 : vector<1x4x16xf32> to vector<4x16xf32>
    %c0_130 = arith.constant 0 : index
    %c120 = arith.constant 120 : index
    %c0_131 = arith.constant 0 : index
    %152 = vector.load %arg2[%c0_130, %c120, %c0_131] : memref<1x128x16xf32, #tpu.memory_space<vmem>>, vector<1x4x16xf32>
    %153 = vector.shape_cast %152 : vector<1x4x16xf32> to vector<4x16xf32>
    %154 = vector.shape_cast %151 : vector<4x16xf32> to vector<1x4x16xf32>
    tpu.vector_store %arg2[%c0_130, %c120, %c0_131], %154 {strides = array<i32>} : memref<1x128x16xf32, #tpu.memory_space<vmem>>, vector<1x4x16xf32>,
    %c0_132 = arith.constant 0 : index
    %c79 = arith.constant 79 : index
    %c0_133 = arith.constant 0 : index
    %155 = tpu.strided_load %arg1[%c0_132, %c79, %c0_133] {strides = array<i32: 1, 16, 1>} : memref<1x128x16xf32, #tpu.memory_space<vmem>>, vector<1x4x16xf32>
    %156 = vector.shape_cast %155 : vector<1x4x16xf32> to vector<4x16xf32>
    %c0_134 = arith.constant 0 : index
    %c124 = arith.constant 124 : index
    %c0_135 = arith.constant 0 : index
    %157 = vector.load %arg2[%c0_134, %c124, %c0_135] : memref<1x128x16xf32, #tpu.memory_space<vmem>>, vector<1x4x16xf32>
    %158 = vector.shape_cast %157 : vector<1x4x16xf32> to vector<4x16xf32>
    %159 = vector.shape_cast %156 : vector<4x16xf32> to vector<1x4x16xf32>
    tpu.vector_store %arg2[%c0_134, %c124, %c0_135], %159 {strides = array<i32>} : memref<1x128x16xf32, #tpu.memory_space<vmem>>, vector<1x4x16xf32>,
    return
  }
  func.func @transform_0(%arg0: i32) -> (i32, i32, i32) {
    %c0_i32 = arith.constant 0 : i32
    %c0_i32_0 = arith.constant 0 : i32
    %c0_i32_1 = arith.constant 0 : i32
    return %arg0, %c0_i32, %c0_i32_0 : i32, i32, i32
  }
  func.func @transform_1(%arg0: i32) -> (i32, i32, i32) {
    %c0_i32 = arith.constant 0 : i32
    %c0_i32_0 = arith.constant 0 : i32
    %c0_i32_1 = arith.constant 0 : i32
    return %arg0, %c0_i32, %c0_i32_0 : i32, i32, i32
  }
}

</mosaic_0001>

<llo_original>
// kernel: tpu_custom_call.1
$region0: #{tpu_custom_call.1}
  #allocation0 [shape = 'u32[]', space=smem, size = 0x4, offset = 0x4, fixed_abs, tag = 'smem constant byte address 0x4 - core index']
  #allocation1 [shape = 'u32[144,128]{1,0:T(1,128)}', space=vmem, size = 0x12000, scoped, tag = 'internal scratch']
  %s0 = inlined_call_operand.vmem [shape: f32[1,128,16], index: 0, kind: input, shape index: {}]
  %s1 = inlined_call_operand.vmem [shape: f32[1,128,16], index: 1, kind: output, shape index: {}]
  %s2 = sld [smem:[#allocation0]]
  $region14: #{tpu_custom_call.1} parent=0
    _
  %s4 = ssub.s32 1, %s2
  %s5 = scalar_select 0, %s4, %s2
  // Predicated region
  $region2: #{tpu_custom_call.1} parent=0 // pred_check
    _
  $region3: #{tpu_custom_call.1} parent=0 // pred_check_branch
    %7 = sbr.rel (0) target = $region5
  $region4: #{tpu_custom_call.1} parent=0 // pred_region
    _
  $region5: #{tpu_custom_call.1} parent=0 // pred_fallthru
    _
  %v8 = vld [vmem:[%s0] ss:$16 sm:$0x3]
  %v9 = vld [vmem:[%s0] ss:$16 sm:$0xc]
  %v10 = vor.u32 %v8, %v9
  %vm11 = vcmask 125952
  %12 = vst.msk [vmem:[%s1] sm:$0xf] %vm11, %v10
  %s13 = scalar_lea.vmem %s0, 1
  %v14 = vld [vmem:[%s13] ss:$16 sm:$0x3]
  %v15 = vld [vmem:[%s13] ss:$16 sm:$0xc]
  %v16 = vor.u32 %v14, %v15
  %17 = vst.msk [vmem:[%s1 + $0x4] sm:$0xf] %vm11, %v16
  %s18 = scalar_lea.vmem %s0, 2
  %v19 = vld [vmem:[%s18] ss:$16 sm:$0x3]
  %v20 = vld [vmem:[%s18] ss:$16 sm:$0xc]
  %v21 = vor.u32 %v19, %v20
  %22 = vst.msk [vmem:[%s1 + $0x8] sm:$0xf] %vm11, %v21
  %s23 = scalar_lea.vmem %s0, 3
  %v24 = vld [vmem:[%s23] ss:$16 sm:$0x3]
  %v25 = vld [vmem:[%s23] ss:$16 sm:$0xc]
  %v26 = vor.u32 %v24, %v25
  %27 = vst.msk [vmem:[%s1 + $0xc] sm:$0xf] %vm11, %v26
  %s28 = scalar_lea.vmem %s0, 4
  %v29 = vld [vmem:[%s28] ss:$16 sm:$0x3]
  %v30 = vld [vmem:[%s28] ss:$16 sm:$0xc]
  %v31 = vor.u32 %v29, %v30
  %32 = vst.msk [vmem:[%s1 + $0x10] sm:$0xf] %vm11, %v31
  %s33 = scalar_lea.vmem %s0, 5
  %v34 = vld [vmem:[%s33] ss:$16 sm:$0x3]
  %v35 = vld [vmem:[%s33] ss:$16 sm:$0xc]
  %v36 = vor.u32 %v34, %v35
  %37 = vst.msk [vmem:[%s1 + $0x14] sm:$0xf] %vm11, %v36
  %s38 = scalar_lea.vmem %s0, 6
  %v39 = vld [vmem:[%s38] ss:$16 sm:$0x3]
  %v40 = vld [vmem:[%s38] ss:$16 sm:$0xc]
  %v41 = vor.u32 %v39, %v40
  %42 = vst.msk [vmem:[%s1 + $0x18] sm:$0xf] %vm11, %v41
  %s43 = scalar_lea.vmem %s0, 7
  %v44 = vld [vmem:[%s43] ss:$16 sm:$0x3]
  %v45 = vld [vmem:[%s43] ss:$16 sm:$0xc]
  %v46 = vor.u32 %v44, %v45
  %47 = vst.msk [vmem:[%s1 + $0x1c] sm:$0xf] %vm11, %v46
  %s48 = scalar_lea.vmem %s0, 8
  %v49 = vld [vmem:[%s48] ss:$16 sm:$0x3]
  %v50 = vld [vmem:[%s48] ss:$16 sm:$0xc]
  %v51 = vor.u32 %v49, %v50
  %52 = vst.msk [vmem:[%s1 + $0x20] sm:$0xf] %vm11, %v51
  %s53 = scalar_lea.vmem %s0, 9
  %v54 = vld [vmem:[%s53] ss:$16 sm:$0x3]
  %v55 = vld [vmem:[%s53] ss:$16 sm:$0xc]
  %v56 = vor.u32 %v54, %v55
  %57 = vst.msk [vmem:[%s1 + $0x24] sm:$0xf] %vm11, %v56
  %s58 = scalar_lea.vmem %s0, 10
  %v59 = vld [vmem:[%s58] ss:$16 sm:$0x3]
  %v60 = vld [vmem:[%s58] ss:$16 sm:$0xc]
  %v61 = vor.u32 %v59, %v60
  %62 = vst.msk [vmem:[%s1 + $0x28] sm:$0xf] %vm11, %v61
  %s63 = scalar_lea.vmem %s0, 11
  %v64 = vld [vmem:[%s63] ss:$16 sm:$0x3]
  %v65 = vld [vmem:[%s63] ss:$16 sm:$0xc]
  %v66 = vor.u32 %v64, %v65
  %67 = vst.msk [vmem:[%s1 + $0x2c] sm:$0xf] %vm11, %v66
  %s68 = scalar_lea.vmem %s0, 12
  %v69 = vld [vmem:[%s68] ss:$16 sm:$0x3]
  %v70 = vld [vmem:[%s68] ss:$16 sm:$0xc]
  %v71 = vor.u32 %v69, %v70
  %72 = vst.msk [vmem:[%s1 + $0x30] sm:$0xf] %vm11, %v71
  %s73 = scalar_lea.vmem %s0, 13
  %v74 = vld [vmem:[%s73] ss:$16 sm:$0x3]
  %v75 = vld [vmem:[%s73] ss:$16 sm:$0xc]
  %v76 = vor.u32 %v74, %v75
  %77 = vst.msk [vmem:[%s1 + $0x34] sm:$0xf] %vm11, %v76
  %s78 = scalar_lea.vmem %s0, 14
  %v79 = vld [vmem:[%s78] ss:$16 sm:$0x3]
  %v80 = vld [vmem:[%s78] ss:$16 sm:$0xc]
  %v81 = vor.u32 %v79, %v80
  %82 = vst.msk [vmem:[%s1 + $0x38] sm:$0xf] %vm11, %v81
  %s83 = scalar_lea.vmem %s0, 15
  %v84 = vld [vmem:[%s83] ss:$16 sm:$0x3]
  %v85 = vld [vmem:[%s83] ss:$16 sm:$0xc]
  %v86 = vor.u32 %v84, %v85
  %87 = vst.msk [vmem:[%s1 + $0x3c] sm:$0xf] %vm11, %v86
  %s88 = scalar_lea.vmem %s0, 64
  %v89 = vld [vmem:[%s88] ss:$16 sm:$0x3]
  %v90 = vld [vmem:[%s88] ss:$16 sm:$0xc]
  %v91 = vor.u32 %v89, %v90
  %92 = vst.msk [vmem:[%s1 + $0x40] sm:$0xf] %vm11, %v91
  %s93 = scalar_lea.vmem %s0, 65
  %v94 = vld [vmem:[%s93] ss:$16 sm:$0x3]
  %v95 = vld [vmem:[%s93] ss:$16 sm:$0xc]
  %v96 = vor.u32 %v94, %v95
  %97 = vst.msk [vmem:[%s1 + $0x44] sm:$0xf] %vm11, %v96
  %s98 = scalar_lea.vmem %s0, 66
  %v99 = vld [vmem:[%s98] ss:$16 sm:$0x3]
  %v100 = vld [vmem:[%s98] ss:$16 sm:$0xc]
  %v101 = vor.u32 %v99, %v100
  %102 = vst.msk [vmem:[%s1 + $0x48] sm:$0xf] %vm11, %v101
  %s103 = scalar_lea.vmem %s0, 67
  %v104 = vld [vmem:[%s103] ss:$16 sm:$0x3]
  %v105 = vld [vmem:[%s103] ss:$16 sm:$0xc]
  %v106 = vor.u32 %v104, %v105
  %107 = vst.msk [vmem:[%s1 + $0x4c] sm:$0xf] %vm11, %v106
  %s108 = scalar_lea.vmem %s0, 68
  %v109 = vld [vmem:[%s108] ss:$16 sm:$0x3]
  %v110 = vld [vmem:[%s108] ss:$16 sm:$0xc]
  %v111 = vor.u32 %v109, %v110
  %112 = vst.msk [vmem:[%s1 + $0x50] sm:$0xf] %vm11, %v111
  %s113 = scalar_lea.vmem %s0, 69
  %v114 = vld [vmem:[%s113] ss:$16 sm:$0x3]
  %v115 = vld [vmem:[%s113] ss:$16 sm:$0xc]
  %v116 = vor.u32 %v114, %v115
  %117 = vst.msk [vmem:[%s1 + $0x54] sm:$0xf] %vm11, %v116
  %s118 = scalar_lea.vmem %s0, 70
  %v119 = vld [vmem:[%s118] ss:$16 sm:$0x3]
  %v120 = vld [vmem:[%s118] ss:$16 sm:$0xc]
  %v121 = vor.u32 %v119, %v120
  %122 = vst.msk [vmem:[%s1 + $0x58] sm:$0xf] %vm11, %v121
  %s123 = scalar_lea.vmem %s0, 71
  %v124 = vld [vmem:[%s123] ss:$16 sm:$0x3]
  %v125 = vld [vmem:[%s123] ss:$16 sm:$0xc]
  %v126 = vor.u32 %v124, %v125
  %127 = vst.msk [vmem:[%s1 + $0x5c] sm:$0xf] %vm11, %v126
  %s128 = scalar_lea.vmem %s0, 72
  %v129 = vld [vmem:[%s128] ss:$16 sm:$0x3]
  %v130 = vld [vmem:[%s128] ss:$16 sm:$0xc]
  %v131 = vor.u32 %v129, %v130
  %132 = vst.msk [vmem:[%s1 + $0x60] sm:$0xf] %vm11, %v131
  %s133 = scalar_lea.vmem %s0, 73
  %v134 = vld [vmem:[%s133] ss:$16 sm:$0x3]
  %v135 = vld [vmem:[%s133] ss:$16 sm:$0xc]
  %v136 = vor.u32 %v134, %v135
  %137 = vst.msk [vmem:[%s1 + $0x64] sm:$0xf] %vm11, %v136
  %s138 = scalar_lea.vmem %s0, 74
  %v139 = vld [vmem:[%s138] ss:$16 sm:$0x3]
  %v140 = vld [vmem:[%s138] ss:$16 sm:$0xc]
  %v141 = vor.u32 %v139, %v140
  %142 = vst.msk [vmem:[%s1 + $0x68] sm:$0xf] %vm11, %v141
  %s143 = scalar_lea.vmem %s0, 75
  %v144 = vld [vmem:[%s143] ss:$16 sm:$0x3]
  %v145 = vld [vmem:[%s143] ss:$16 sm:$0xc]
  %v146 = vor.u32 %v144, %v145
  %147 = vst.msk [vmem:[%s1 + $0x6c] sm:$0xf] %vm11, %v146
  %s148 = scalar_lea.vmem %s0, 76
  %v149 = vld [vmem:[%s148] ss:$16 sm:$0x3]
  %v150 = vld [vmem:[%s148] ss:$16 sm:$0xc]
  %v151 = vor.u32 %v149, %v150
  %152 = vst.msk [vmem:[%s1 + $0x70] sm:$0xf] %vm11, %v151
  %s153 = scalar_lea.vmem %s0, 77
  %v154 = vld [vmem:[%s153] ss:$16 sm:$0x3]
  %v155 = vld [vmem:[%s153] ss:$16 sm:$0xc]
  %v156 = vor.u32 %v154, %v155
  %157 = vst.msk [vmem:[%s1 + $0x74] sm:$0xf] %vm11, %v156
  %s158 = scalar_lea.vmem %s0, 78
  %v159 = vld [vmem:[%s158] ss:$16 sm:$0x3]
  %v160 = vld [vmem:[%s158] ss:$16 sm:$0xc]
  %v161 = vor.u32 %v159, %v160
  %162 = vst.msk [vmem:[%s1 + $0x78] sm:$0xf] %vm11, %v161
  %s163 = scalar_lea.vmem %s0, 79
  %v164 = vld [vmem:[%s163] ss:$16 sm:$0x3]
  %v165 = vld [vmem:[%s163] ss:$16 sm:$0xc]
  %v166 = vor.u32 %v164, %v165
  %167 = vst.msk [vmem:[%s1 + $0x7c] sm:$0xf] %vm11, %v166
  // Predicated region
  $region6: #{tpu_custom_call.1} parent=0 // pred_check
    _
  $region7: #{tpu_custom_call.1} parent=0 // pred_check_branch
    %169 = sbr.rel (0) target = $region9
  $region8: #{tpu_custom_call.1} parent=0 // pred_region
    _
  $region9: #{tpu_custom_call.1} parent=0 // pred_fallthru
    _
  // Predicated region
  $region10: #{tpu_custom_call.1} parent=0 // pred_check
    _
  $region11: #{tpu_custom_call.1} parent=0 // pred_check_branch
    %171 = sbr.rel (0) target = $region13
  $region12: #{tpu_custom_call.1} parent=0 // pred_region
    _
  $region13: #{tpu_custom_call.1} parent=0 // pred_fallthru
    _

</llo_original>
